<compile_context>
chip_gen: v5e
topology: v5e:2x2
jax: 0.10.0
libtpu: 0.0.40
codegen_flags: <defaults>
</compile_context>

<pallas_src>
import math

import jax
import jax.numpy as jnp
from jax.experimental import pallas as pl
from jax.experimental.pallas import tpu as pltpu

_LANE = 128              # lane width (last-dim granularity)
_SMALL_BYTES = 1 << 20   # below this, let XLA handle it (launch cost dominates)


def _sublane(itemsize: int) -> int:
    # Packed-sublane granularity: 8 rows for 4-byte, 16 for 2-byte, 32 for 1-byte.
    return max(8, 32 // max(1, itemsize))


def _round_down(x: int, m: int) -> int:
    return (x // m) * m


def _tpu_budget():
    """Returns (target_block_bytes, base_vmem_limit_bytes), generation aware."""
    cap = None
    try:
        info = pltpu.get_tpu_info()
        cap = getattr(info, "vmem_capacity_bytes", None)
    except Exception:
        cap = None
    if cap is None:
        cap = 64 * 1024 * 1024                       # conservative (v7x per-core)
    if cap >= 96 * 1024 * 1024:                      # v5e / v6e: 128 MiB VMEM
        return 12 * 1024 * 1024, 64 * 1024 * 1024
    return 8 * 1024 * 1024, 40 * 1024 * 1024         # v7x: 64 MiB VMEM


def _scale_kernel(inv_t_ref, x_ref, o_ref):
    # inv_t_ref: (1,) f32 in SMEM; x_ref / o_ref: (bm, bn) VMEM tiles.
    o_ref[...] = (x_ref[...] * inv_t_ref[0]).astype(o_ref.dtype)


def _launch_2d(x2: jax.Array, inv_t: jax.Array) -> jax.Array:
    M, N = x2.shape
    itemsize = jnp.dtype(x2.dtype).itemsize
    sub = _sublane(itemsize)
    target_bytes, vmem_limit = _tpu_budget()

    # ---- column block: lane dense when possible ----
    if N % _LANE == 0:
        cols_budget = max(_LANE, target_bytes // (sub * itemsize))
        bn = min(N, _round_down(cols_budget, _LANE))
    else:
        # "block == full dim" exception: no padding, edge lanes use masked stores.
        bn = N

    # ---- row block: fill the byte budget, dtype-aware sublane granularity ----
    rows_budget = max(sub, target_bytes // (bn * itemsize))
    rows = max(sub, _round_down(rows_budget, sub))
    bm = M if rows >= M else rows

    # ---- make sure v7x's two TensorCores both get work on single-block grids ----
    if pl.cdiv(M, bm) * pl.cdiv(N, bn) < 2:
        if M >= 2 * sub:
            bm = max(sub, _round_down(pl.cdiv(M, 2), sub))
        elif N % _LANE == 0 and N >= 2 * _LANE:
            bn = max(_LANE, _round_down(pl.cdiv(N, 2), _LANE))

    grid = (pl.cdiv(M, bm), pl.cdiv(N, bn))
    block_bytes = bm * bn * itemsize
    # in + out, double-buffered, plus headroom (also lifts v5e's 16 MiB default).
    vmem_limit = int(max(vmem_limit, 4 * block_bytes + (4 << 20)))

    return pl.pallas_call(
        _scale_kernel,
        out_shape=jax.ShapeDtypeStruct((M, N), x2.dtype),
        grid_spec=pltpu.PrefetchScalarGridSpec(
            num_scalar_prefetch=0,
            grid=grid,
            in_specs=[
                # 1/temperature: whole (1,) f32 array in SMEM, same for every tile.
                pl.BlockSpec(memory_space=pltpu.SMEM),
                pl.BlockSpec((bm, bn), lambda i, j: (i, j)),
            ],
            out_specs=pl.BlockSpec((bm, bn), lambda i, j: (i, j)),
        ),
        compiler_params=pltpu.CompilerParams(
            dimension_semantics=("parallel", "parallel"),
            vmem_limit_bytes=vmem_limit,
        ),
    )(inv_t, x2)


def temperature_scale(logits: jax.Array, temperature, *, force_pallas: bool = False) -> jax.Array:
    """TemperatureScaling.forward: logits / temperature (temperature is a (1,) parameter)."""
    orig_shape = logits.shape
    if logits.ndim == 0:
        out = logits.astype(jnp.float32) / jnp.asarray(temperature, jnp.float32).reshape(())
        return out.astype(logits.dtype)

    N = orig_shape[-1]
    M = max(1, math.prod(orig_shape[:-1]))
    total = M * N
    itemsize = jnp.dtype(logits.dtype).itemsize

    # Tiny / fusable inputs: a standalone bandwidth-bound kernel can never beat
    # XLA fusing `x * (1/T)` into its producer/consumer.
    if total == 0 or (not force_pallas and total * itemsize < _SMALL_BYTES):
        out = logits.astype(jnp.float32) / jnp.asarray(temperature, jnp.float32).reshape(())
        return out.astype(logits.dtype)

    # Reciprocal once in the wrapper; kernel body is a pure splat-multiply.
    inv_t = (1.0 / jnp.asarray(temperature, jnp.float32)).reshape((1,))

    x2 = logits.reshape(M, N)
    if N % _LANE != 0 and total % _LANE == 0:
        # Elementwise op -> layout is free to change: retile the contiguous flat
        # view lane-densely instead of padding a narrow class axis up to 128.
        x2 = x2.reshape(total // _LANE, _LANE)
    # TODO(synk): when neither N nor M*N is a multiple of 128 we fall back to a
    # full-width (bm, N) block with masked lane stores; a fully general flat
    # path would need 1-D partial blocks.

    out = _launch_2d(x2, inv_t)
    return out.reshape(orig_shape)


if __name__ == "__main__":
    key = jax.random.PRNGKey(0)
    k1, k2, k3, k4, k5 = jax.random.split(key, 5)

    temperature1 = jnp.ones((1,), dtype=jnp.float32)
    temperature2 = jnp.asarray([1.7], dtype=jnp.float32)

    # --- 1) Lane-aligned small shape (force Pallas; direct 2-D path) ---
    logits = jax.random.normal(k1, (8, 128), dtype=jnp.float32)
    out = temperature_scale(logits, temperature1, force_pallas=True)
    jax.block_until_ready(out)
    assert jnp.allclose(out, logits / temperature1, atol=1e-6), "mismatch (8x128, T=1.0)"

    out2 = temperature_scale(logits, temperature2, force_pallas=True)
    jax.block_until_ready(out2)
    assert jnp.allclose(out2, logits / temperature2, atol=1e-5), "mismatch (8x128, T=1.7)"

    # --- 2) Narrow class axis (N=10), flat lane-dense retile path (M*N % 128 == 0) ---
    logits_c10 = jax.random.normal(k2, (64, 10), dtype=jnp.float32)
    out3 = temperature_scale(logits_c10, temperature2, force_pallas=True)
    jax.block_until_ready(out3)
    assert jnp.allclose(out3, logits_c10 / temperature2, atol=1e-5), "mismatch (64x10)"

    # --- 3) Fully unaligned shape: full-width (bm, N) block, no pad round-trip ---
    logits_odd = jax.random.normal(k3, (10, 100), dtype=jnp.float32)
    out4 = temperature_scale(logits_odd, temperature2, force_pallas=True)
    jax.block_until_ready(out4)
    assert jnp.allclose(out4, logits_odd / temperature2, atol=1e-5), "mismatch (10x100)"

    # --- 4) bf16 exercises the dtype-aware (16-row) sublane rounding ---
    logits_bf16 = jax.random.normal(k4, (32, 128), dtype=jnp.bfloat16)
    out5 = temperature_scale(logits_bf16, temperature2, force_pallas=True)
    jax.block_until_ready(out5)
    ref5 = (logits_bf16.astype(jnp.float32) / 1.7)
    assert jnp.allclose(out5.astype(jnp.float32), ref5, rtol=3e-2, atol=3e-2), "mismatch bf16"

    # --- 5) Moderate size hits the Pallas path automatically (multi-block grid) ---
    logits_big = jax.random.normal(k5, (1024, 256), dtype=jnp.float32)
    out6 = temperature_scale(logits_big, temperature2)
    jax.block_until_ready(out6)
    assert jnp.allclose(out6, logits_big / temperature2, atol=1e-5), "mismatch (1024x256)"

    print("KERNEL_OK")
</pallas_src>

<mosaic_0001>
module attributes {stable_mosaic.version = 11 : i64} {
  func.func @_scale_kernel(%arg0: i32, %arg1: i32, %arg2: memref<1xf32, #tpu.memory_space<smem>>, %arg3: memref<8x128xf32, #tpu.memory_space<vmem>>, %arg4: memref<8x128xf32, #tpu.memory_space<vmem>>) attributes {dimension_semantics = [#tpu.dimension_semantics<parallel>, #tpu.dimension_semantics<parallel>], iteration_bounds = array<i64: 1, 1>, scalar_prefetch = 0 : i64, scratch_operands = 0 : i64, tpu.core_type = #tpu.core_type<tc>, window_params = [{transform_indices = @transform_0, window_bounds = array<i64: 1>}, {transform_indices = @transform_1, window_bounds = array<i64: 8, 128>}, {transform_indices = @transform_2, window_bounds = array<i64: 8, 128>}]} {
    %c0 = arith.constant 0 : index
    %c0_0 = arith.constant 0 : index
    %0 = vector.load %arg3[%c0, %c0_0] : memref<8x128xf32, #tpu.memory_space<vmem>>, vector<8x128xf32>
    %c0_1 = arith.constant 0 : index
    %1 = memref.load %arg2[%c0_1] : memref<1xf32, #tpu.memory_space<smem>>
    %2 = vector.broadcast %1 : f32 to vector<8x128xf32>
    %3 = arith.mulf %0, %2 : vector<8x128xf32>
    %c0_2 = arith.constant 0 : index
    %c0_3 = arith.constant 0 : index
    %4 = vector.load %arg4[%c0_2, %c0_3] : memref<8x128xf32, #tpu.memory_space<vmem>>, vector<8x128xf32>
    tpu.vector_store %arg4[%c0_2, %c0_3], %3 {strides = array<i32>} : memref<8x128xf32, #tpu.memory_space<vmem>>, vector<8x128xf32>,
    return
  }
  func.func @transform_0(%arg0: i32, %arg1: i32) -> i32 {
    %c0_i32 = arith.constant 0 : i32
    %c0_i32_0 = arith.constant 0 : i32
    return %c0_i32 : i32
  }
  func.func @transform_1(%arg0: i32, %arg1: i32) -> (i32, i32) {
    %c0_i32 = arith.constant 0 : i32
    return %arg0, %arg1 : i32, i32
  }
  func.func @transform_2(%arg0: i32, %arg1: i32) -> (i32, i32) {
    %c0_i32 = arith.constant 0 : i32
    return %arg0, %arg1 : i32, i32
  }
}

</mosaic_0001>

<llo_original>
// kernel: tpu_custom_call.1
$region0: #{tpu_custom_call.1}
  #allocation0 [shape = 'u32[]', space=smem, size = 0x4, offset = 0x4, fixed_abs, tag = 'smem constant byte address 0x4 - core index']
  #allocation1 [shape = 'u32[72,128]{1,0:T(1,128)}', space=vmem, size = 0x9000, scoped, tag = 'internal scratch']
  #allocation2 [shape = 'f32[1]{0:T(128)S(6)}', space=smem, size = 0x200, scoped, tag = 'scoped memory for tpu_custom_call.1']
  %s0 = inlined_call_operand.<no memory space> [shape: f32[1], index: 0, kind: input, shape index: {}]
  %s1 = inlined_call_operand.hbm [shape: f32[8,128], index: 1, kind: input, shape index: {}]
  %s2 = inlined_call_operand.hbm [shape: f32[8,128], index: 2, kind: output, shape index: {}]
  %s3 = sld [smem:[#allocation0]]
  $region22: #{tpu_custom_call.1} parent=0
    _
  %s5 = ssub.s32 1, %s3
  %s6 = scalar_select 0, %s5, %s3
  %7 = sst [smem:[#allocation2]] %s0
  $region1: #{tpu_custom_call.1} parent=0
    #allocation3 [shape = 'u8[4096]{0}', space=vmem, size = 0x1000, scoped, tag = 'input window, operand 1, single buffered']
    #allocation4 [shape = 's32[1]{0}', space=sflag, size = 0x4, scoped, tag = 'scoped memory for tpu_custom_call.1']
    #allocation5 [shape = 's32[1]{0}', space=sflag, size = 0x4, scoped, tag = 'scoped memory for tpu_custom_call.1']
    #allocation6 [shape = 'u8[4096]{0}', space=vmem, size = 0x1000, scoped, tag = 'output window, operand 0, single buffered']
    %8 = vsyncpa [#allocation4], 0
    %9 = vsyncpa [#allocation5], 0
    // Predicated region
    $region2: #{tpu_custom_call.1} parent=1 // pred_check
      _
    $region3: #{tpu_custom_call.1} parent=1 // pred_check_branch
      %11 = sbr.rel (0) target = $region5
    $region4: #{tpu_custom_call.1} parent=1 // pred_region
      _
    $region5: #{tpu_custom_call.1} parent=1 // pred_fallthru
      _
    // Predicated region
    $region6: #{tpu_custom_call.1} parent=1 // pred_check
      _
    $region7: #{tpu_custom_call.1} parent=1 // pred_check_branch
      %13 = sbr.rel (0) target = $region9
    $region8: #{tpu_custom_call.1} parent=1 // pred_region
      %15 = vsyncadd [#allocation4], 0
      %s17 = sshll.u32 %s1, 4
      %s18 = int_to_ptr.hbm [resolvable:$true] %s17
      %s19 = sshll.u32 [#allocation3], 4
      %s20 = int_to_ptr.vmem [resolvable:$true] %s19
      %22 = dma.hbm_to_vmem [thread:$0]  %s18, 128, %s20, [#allocation4]
    $region9: #{tpu_custom_call.1} parent=1 // pred_fallthru
      _
    // Predicated region
    $region10: #{tpu_custom_call.1} parent=1 // pred_check
      _
    $region11: #{tpu_custom_call.1} parent=1 // pred_check_branch
      %24 = sbr.rel (0) target = $region13
    $region12: #{tpu_custom_call.1} parent=1 // pred_region
      %26 = dma.done [#allocation4], 128
    $region13: #{tpu_custom_call.1} parent=1 // pred_fallthru
      _
    %v27 = vld [vmem:[#allocation3] sm:$0xff]
    %s28 = sld [smem:[#allocation2]]
    %v29 = vstv %s28
    %v30 = vmul.f32 %v27, %v29
    %31 = vst [vmem:[#allocation6] sm:$0xff] %v30
    // Predicated region
    $region14: #{tpu_custom_call.1} parent=1 // pred_check
      _
    $region15: #{tpu_custom_call.1} parent=1 // pred_check_branch
      %33 = sbr.rel (0) target = $region17
    $region16: #{tpu_custom_call.1} parent=1 // pred_region
      %35 = vsyncadd [#allocation5], 0
      %s37 = sshll.u32 [#allocation6], 4
      %s38 = int_to_ptr.vmem [resolvable:$true] %s37
      %s39 = sshll.u32 %s2, 4
      %s40 = int_to_ptr.hbm [resolvable:$true] %s39
      %42 = dma.vmem_to_hbm [thread:$0]  %s38, 128, %s40, [#allocation5]
    $region17: #{tpu_custom_call.1} parent=1 // pred_fallthru
      _
    // Predicated region
    $region18: #{tpu_custom_call.1} parent=1 // pred_check
      _
    $region19: #{tpu_custom_call.1} parent=1 // pred_check_branch
      %44 = sbr.rel (0) target = $region21
    $region20: #{tpu_custom_call.1} parent=1 // pred_region
      %46 = dma.done [#allocation5], 128
    $region21: #{tpu_custom_call.1} parent=1 // pred_fallthru
      _
    %47 = vsyncpa [#allocation4], 1
    %48 = vsyncpa [#allocation5], 1

</llo_original>
